<compile_context>
chip_gen: v5e
topology: v5e:2x2
jax: 0.10.0
libtpu: 0.0.40
codegen_flags: <defaults>
</compile_context>

<pallas_src>
import functools

import jax
import jax.numpy as jnp
from jax.experimental import pallas as pl
from jax.experimental.pallas import tpu as pltpu


def _siglip_attn_head_kernel(
    x_ref,                    # (1, S, E)   hidden states for this batch
    wq_ref, bq_ref,           # (1, E, Dh), (1, 1, Dh)  (scale pre-folded)
    wk_ref, bk_ref,           # (1, E, Dh), (1, 1, Dh)
    wv_ref, bv_ref,           # (1, E, Dh), (1, 1, Dh)
    wo_ref,                   # (1, Dh, E)
    bo_ref,                   # (1, E)
    out_ref,                  # (1, S, E)   attn output (accumulated over heads)
    attnw_ref,                # (1, 1, S, S) softmax probs for this head
    acc_ref,                  # scratch (S, E) fp32 accumulator
):
    h = pl.program_id(1)
    x = x_ref[0]                               # (S, E)
    dt = x.dtype

    # ---- per-head q/k/v projections (MXU, fp32 accumulate) ----
    # scale is already folded into wq/bq in the wrapper.
    q = (jnp.dot(x, wq_ref[0], preferred_element_type=jnp.float32)
         + bq_ref[0]).astype(dt)               # (S, Dh)
    k = (jnp.dot(x, wk_ref[0], preferred_element_type=jnp.float32)
         + bk_ref[0]).astype(dt)               # (S, Dh)
    v = (jnp.dot(x, wv_ref[0], preferred_element_type=jnp.float32)
         + bv_ref[0]).astype(dt)               # (S, Dh)

    # ---- scaled dot-product attention for this head ----
    scores = jnp.dot(q, k.T, preferred_element_type=jnp.float32)   # (S, S) f32

    # softmax in float32 (matches torch.softmax(dtype=float32))
    m = jnp.max(scores, axis=-1, keepdims=True)
    e = jnp.exp(scores - m)
    denom = jnp.sum(e, axis=-1, keepdims=True)
    probs_f32 = e * pl.reciprocal(denom)       # exact reciprocal (EUP), then VPU mul
    probs = probs_f32.astype(dt)               # cast back to query dtype

    attnw_ref[0, 0] = probs

    ctx = jnp.dot(probs, v, preferred_element_type=jnp.float32).astype(dt)  # (S, Dh)

    # ---- output projection, accumulated over the head grid axis ----
    @pl.when(h == 0)
    def _init():
        acc_ref[...] = jnp.zeros_like(acc_ref)

    acc_ref[...] += jnp.dot(ctx, wo_ref[0], preferred_element_type=jnp.float32)

    @pl.when(h == pl.num_programs(1) - 1)
    def _finalize():
        out_ref[0] = (acc_ref[...] + bo_ref[...].astype(jnp.float32)
                      ).astype(out_ref.dtype)


def siglip_attention(hidden_states, params, *, num_heads):
    """hidden_states: [B, S, E]. params: PyTorch-style (out, in) weights + biases.

    The wrapper pre-transposes / pre-slices the weights per head and folds the
    softmax scale into the q projection, so the kernel is pure MXU + softmax.
    """
    B, S, E = hidden_states.shape
    H = num_heads
    Dh = E // H
    scale = Dh ** (-0.5)
    dtype = hidden_states.dtype

    def per_head_in_proj(w, b, s=1.0):
        # torch Linear: y = x @ W.T + b,  W: (out, in)
        wt = (jnp.asarray(w, jnp.float32).T * s).astype(dtype)        # (E_in, E_out)
        wh = wt.reshape(E, H, Dh).transpose(1, 0, 2)                  # (H, E, Dh)
        bh = (jnp.asarray(b, jnp.float32) * s).astype(dtype).reshape(H, 1, Dh)
        return wh, bh

    wq, bq = per_head_in_proj(params['q_w'], params['q_b'], scale)    # scale folded
    wk, bk = per_head_in_proj(params['k_w'], params['k_b'])
    wv, bv = per_head_in_proj(params['v_w'], params['v_b'])

    wo = jnp.asarray(params['o_w'], dtype).T.reshape(H, Dh, E)        # (H, Dh, E)
    bo = jnp.asarray(params['o_b'], dtype).reshape(1, E)              # (1, E)

    kernel = functools.partial(_siglip_attn_head_kernel)

    x_spec = pl.BlockSpec((1, S, E), lambda b, h: (b, 0, 0))
    wqkv_spec = pl.BlockSpec((1, E, Dh), lambda b, h: (h, 0, 0))
    bqkv_spec = pl.BlockSpec((1, 1, Dh), lambda b, h: (h, 0, 0))
    wo_spec = pl.BlockSpec((1, Dh, E), lambda b, h: (h, 0, 0))
    bo_spec = pl.BlockSpec((1, E), lambda b, h: (0, 0))

    out, attn_w = pl.pallas_call(
        kernel,
        out_shape=(
            jax.ShapeDtypeStruct((B, S, E), dtype),
            jax.ShapeDtypeStruct((B, H, S, S), dtype),
        ),
        grid_spec=pltpu.PrefetchScalarGridSpec(
            num_scalar_prefetch=0,
            grid=(B, H),                      # head axis last = reduction axis
            in_specs=[
                x_spec,
                wqkv_spec, bqkv_spec,         # q
                wqkv_spec, bqkv_spec,         # k
                wqkv_spec, bqkv_spec,         # v
                wo_spec, bo_spec,             # out proj
            ],
            out_specs=[
                pl.BlockSpec((1, S, E), lambda b, h: (b, 0, 0)),       # accumulator out
                pl.BlockSpec((1, 1, S, S), lambda b, h: (b, h, 0, 0)),  # attn weights
            ],
            scratch_shapes=[pltpu.VMEM((S, E), jnp.float32)],
        ),
        compiler_params=pltpu.CompilerParams(
            dimension_semantics=("parallel", "arbitrary"),
        ),
    )(hidden_states, wq, bq, wk, bk, wv, bv, wo, bo)

    return out, attn_w


def _reference(hidden_states, params, *, num_heads):
    """Pure-JAX reference mirroring the PyTorch forward."""
    B, S, E = hidden_states.shape
    Dh = E // num_heads
    scale = Dh ** (-0.5)

    def lin(x, w, b):
        return x @ w.T + b

    q = lin(hidden_states, params['q_w'], params['q_b'])
    k = lin(hidden_states, params['k_w'], params['k_b'])
    v = lin(hidden_states, params['v_w'], params['v_b'])

    def split(t):
        return t.reshape(B, S, num_heads, Dh).transpose(0, 2, 1, 3)

    q, k, v = split(q), split(k), split(v)
    scores = jnp.einsum('bhqd,bhkd->bhqk', q, k) * scale
    w = jax.nn.softmax(scores.astype(jnp.float32), axis=-1).astype(q.dtype)
    ctx = jnp.einsum('bhqk,bhkd->bhqd', w, v)
    ctx = ctx.transpose(0, 2, 1, 3).reshape(B, S, E)
    out = lin(ctx, params['o_w'], params['o_b'])
    return out, w


if __name__ == "__main__":
    # Small config: batch=2, seq=8, hidden=32, heads=4 (head_dim=8).
    B, S, E, H = 2, 8, 32, 4
    key = jax.random.PRNGKey(0)
    keys = jax.random.split(key, 9)

    hidden_states = jax.random.normal(keys[0], (B, S, E), dtype=jnp.float32)

    def init_linear(kw, kb):
        bound = 1.0 / (E ** 0.5)
        w = jax.random.uniform(kw, (E, E), minval=-bound, maxval=bound,
                               dtype=jnp.float32)
        b = jax.random.uniform(kb, (E,), minval=-bound, maxval=bound,
                               dtype=jnp.float32)
        return w, b

    params = {}
    params['q_w'], params['q_b'] = init_linear(keys[1], keys[2])
    params['k_w'], params['k_b'] = init_linear(keys[3], keys[4])
    params['v_w'], params['v_b'] = init_linear(keys[5], keys[6])
    params['o_w'], params['o_b'] = init_linear(keys[7], keys[8])

    out, attn_w = siglip_attention(hidden_states, params, num_heads=H)
    out = jax.block_until_ready(out)
    attn_w = jax.block_until_ready(attn_w)

    ref_out, ref_w = _reference(hidden_states, params, num_heads=H)
    assert out.shape == (B, S, E)
    assert attn_w.shape == (B, H, S, S)
    assert jnp.allclose(out, ref_out, atol=1e-4, rtol=1e-4)
    assert jnp.allclose(attn_w, ref_w, atol=1e-4, rtol=1e-4)

    print("KERNEL_OK")
</pallas_src>

<mosaic_0001>
module attributes {stable_mosaic.version = 11 : i64} {
  func.func @_siglip_attn_head_kernel(%arg0: i32, %arg1: i32, %arg2: memref<1x8x32xf32, #tpu.memory_space<vmem>>, %arg3: memref<1x32x8xf32, #tpu.memory_space<vmem>>, %arg4: memref<1x1x8xf32, #tpu.memory_space<vmem>>, %arg5: memref<1x32x8xf32, #tpu.memory_space<vmem>>, %arg6: memref<1x1x8xf32, #tpu.memory_space<vmem>>, %arg7: memref<1x32x8xf32, #tpu.memory_space<vmem>>, %arg8: memref<1x1x8xf32, #tpu.memory_space<vmem>>, %arg9: memref<1x8x32xf32, #tpu.memory_space<vmem>>, %arg10: memref<1x32xf32, #tpu.memory_space<vmem>>, %arg11: memref<1x8x32xf32, #tpu.memory_space<vmem>>, %arg12: memref<1x1x8x8xf32, #tpu.memory_space<vmem>>, %arg13: memref<8x32xf32, #tpu.memory_space<vmem>>) attributes {dimension_semantics = [#tpu.dimension_semantics<parallel>, #tpu.dimension_semantics<arbitrary>], iteration_bounds = array<i64: 2, 4>, scalar_prefetch = 0 : i64, scratch_operands = 1 : i64, tpu.core_type = #tpu.core_type<tc>, window_params = [{transform_indices = @transform_0, window_bounds = array<i64: 1, 8, 32>}, {transform_indices = @transform_1, window_bounds = array<i64: 1, 32, 8>}, {transform_indices = @transform_2, window_bounds = array<i64: 1, 1, 8>}, {transform_indices = @transform_3, window_bounds = array<i64: 1, 32, 8>}, {transform_indices = @transform_4, window_bounds = array<i64: 1, 1, 8>}, {transform_indices = @transform_5, window_bounds = array<i64: 1, 32, 8>}, {transform_indices = @transform_6, window_bounds = array<i64: 1, 1, 8>}, {transform_indices = @transform_7, window_bounds = array<i64: 1, 8, 32>}, {pipeline_mode = #tpu.pipeline_mode<synchronous>, transform_indices = @transform_8, window_bounds = array<i64: 1, 32>}, {transform_indices = @transform_9, window_bounds = array<i64: 1, 8, 32>}, {transform_indices = @transform_10, window_bounds = array<i64: 1, 1, 8, 8>}]} {
    %c0 = arith.constant 0 : index
    %c0_0 = arith.constant 0 : index
    %c0_1 = arith.constant 0 : index
    %0 = vector.load %arg2[%c0, %c0_0, %c0_1] : memref<1x8x32xf32, #tpu.memory_space<vmem>>, vector<1x8x32xf32>
    %1 = vector.shape_cast %0 : vector<1x8x32xf32> to vector<8x32xf32>
    %c0_2 = arith.constant 0 : index
    %c0_3 = arith.constant 0 : index
    %c0_4 = arith.constant 0 : index
    %2 = vector.load %arg3[%c0_2, %c0_3, %c0_4] : memref<1x32x8xf32, #tpu.memory_space<vmem>>, vector<1x32x8xf32>
    %3 = vector.shape_cast %2 : vector<1x32x8xf32> to vector<32x8xf32>
    %cst = arith.constant dense<0.000000e+00> : vector<8x8xf32>
    %4 = tpu.matmul %1, %3, %cst {dimension_numbers = #tpu.dot_dimension_numbers<[1], [0], [0], [1], [0, 0, 1, 1], [], []>} : vector<8x32xf32>, vector<32x8xf32>, vector<8x8xf32> -> vector<8x8xf32>
    %c0_5 = arith.constant 0 : index
    %c0_6 = arith.constant 0 : index
    %c0_7 = arith.constant 0 : index
    %5 = vector.load %arg4[%c0_5, %c0_6, %c0_7] : memref<1x1x8xf32, #tpu.memory_space<vmem>>, vector<1x1x8xf32>
    %6 = vector.shape_cast %5 : vector<1x1x8xf32> to vector<1x8xf32>
    %7 = vector.broadcast %6 : vector<1x8xf32> to vector<8x8xf32>
    %8 = arith.addf %4, %7 : vector<8x8xf32>
    %c0_8 = arith.constant 0 : index
    %c0_9 = arith.constant 0 : index
    %c0_10 = arith.constant 0 : index
    %9 = vector.load %arg5[%c0_8, %c0_9, %c0_10] : memref<1x32x8xf32, #tpu.memory_space<vmem>>, vector<1x32x8xf32>
    %10 = vector.shape_cast %9 : vector<1x32x8xf32> to vector<32x8xf32>
    %cst_11 = arith.constant dense<0.000000e+00> : vector<8x8xf32>
    %11 = tpu.matmul %1, %10, %cst_11 {dimension_numbers = #tpu.dot_dimension_numbers<[1], [0], [0], [1], [0, 0, 1, 1], [], []>} : vector<8x32xf32>, vector<32x8xf32>, vector<8x8xf32> -> vector<8x8xf32>
    %c0_12 = arith.constant 0 : index
    %c0_13 = arith.constant 0 : index
    %c0_14 = arith.constant 0 : index
    %12 = vector.load %arg6[%c0_12, %c0_13, %c0_14] : memref<1x1x8xf32, #tpu.memory_space<vmem>>, vector<1x1x8xf32>
    %13 = vector.shape_cast %12 : vector<1x1x8xf32> to vector<1x8xf32>
    %14 = vector.broadcast %13 : vector<1x8xf32> to vector<8x8xf32>
    %15 = arith.addf %11, %14 : vector<8x8xf32>
    %c0_15 = arith.constant 0 : index
    %c0_16 = arith.constant 0 : index
    %c0_17 = arith.constant 0 : index
    %16 = vector.load %arg7[%c0_15, %c0_16, %c0_17] : memref<1x32x8xf32, #tpu.memory_space<vmem>>, vector<1x32x8xf32>
    %17 = vector.shape_cast %16 : vector<1x32x8xf32> to vector<32x8xf32>
    %cst_18 = arith.constant dense<0.000000e+00> : vector<8x8xf32>
    %18 = tpu.matmul %1, %17, %cst_18 {dimension_numbers = #tpu.dot_dimension_numbers<[1], [0], [0], [1], [0, 0, 1, 1], [], []>} : vector<8x32xf32>, vector<32x8xf32>, vector<8x8xf32> -> vector<8x8xf32>
    %c0_19 = arith.constant 0 : index
    %c0_20 = arith.constant 0 : index
    %c0_21 = arith.constant 0 : index
    %19 = vector.load %arg8[%c0_19, %c0_20, %c0_21] : memref<1x1x8xf32, #tpu.memory_space<vmem>>, vector<1x1x8xf32>
    %20 = vector.shape_cast %19 : vector<1x1x8xf32> to vector<1x8xf32>
    %21 = vector.broadcast %20 : vector<1x8xf32> to vector<8x8xf32>
    %22 = arith.addf %18, %21 : vector<8x8xf32>
    %23 = tpu.transpose %15, [1, 0] : vector<8x8xf32> -> vector<8x8xf32>
    %cst_22 = arith.constant dense<0.000000e+00> : vector<8x8xf32>
    %24 = tpu.matmul %8, %23, %cst_22 {dimension_numbers = #tpu.dot_dimension_numbers<[1], [0], [0], [1], [0, 0, 1, 1], [], []>} : vector<8x8xf32>, vector<8x8xf32>, vector<8x8xf32> -> vector<8x8xf32>
    %cst_23 = arith.constant dense<0xFF800000> : vector<8xf32>
    %25 = vector.multi_reduction <maximumf>, %24, %cst_23 [1] : vector<8x8xf32> to vector<8xf32>
    %26 = vector.shape_cast %25 : vector<8xf32> to vector<8x1xf32>
    %27 = vector.broadcast %26 : vector<8x1xf32> to vector<8x8xf32>
    %28 = arith.subf %24, %27 : vector<8x8xf32>
    %29 = math.exp %28 : vector<8x8xf32>
    %cst_24 = arith.constant dense<0.000000e+00> : vector<8xf32>
    %30 = vector.multi_reduction <add>, %29, %cst_24 [1] : vector<8x8xf32> to vector<8xf32>
    %31 = vector.shape_cast %30 : vector<8xf32> to vector<8x1xf32>
    %32 = tpu.reciprocal %31 : vector<8x1xf32> -> vector<8x1xf32>
    %33 = vector.broadcast %32 : vector<8x1xf32> to vector<8x8xf32>
    %34 = arith.mulf %29, %33 : vector<8x8xf32>
    %c0_25 = arith.constant 0 : index
    %c0_26 = arith.constant 0 : index
    %c0_27 = arith.constant 0 : index
    %c0_28 = arith.constant 0 : index
    %35 = vector.load %arg12[%c0_25, %c0_26, %c0_27, %c0_28] : memref<1x1x8x8xf32, #tpu.memory_space<vmem>>, vector<1x1x8x8xf32>
    %36 = vector.shape_cast %35 : vector<1x1x8x8xf32> to vector<8x8xf32>
    %37 = vector.shape_cast %34 : vector<8x8xf32> to vector<1x1x8x8xf32>
    tpu.vector_store %arg12[%c0_25, %c0_26, %c0_27, %c0_28], %37 {strides = array<i32>} : memref<1x1x8x8xf32, #tpu.memory_space<vmem>>, vector<1x1x8x8xf32>,
    %cst_29 = arith.constant dense<0.000000e+00> : vector<8x8xf32>
    %38 = tpu.matmul %34, %22, %cst_29 {dimension_numbers = #tpu.dot_dimension_numbers<[1], [0], [0], [1], [0, 0, 1, 1], [], []>} : vector<8x8xf32>, vector<8x8xf32>, vector<8x8xf32> -> vector<8x8xf32>
    %c0_i32 = arith.constant 0 : i32
    %39 = arith.cmpi eq, %arg1, %c0_i32 : i32
    %40 = arith.extui %39 : i1 to i32
    %c0_i32_30 = arith.constant 0 : i32
    %41 = arith.cmpi ne, %40, %c0_i32_30 : i32
    scf.if %41 {
      %cst_40 = arith.constant 0.000000e+00 : f32
      %51 = vector.broadcast %cst_40 : f32 to vector<8x32xf32>
      %c0_41 = arith.constant 0 : index
      %c0_42 = arith.constant 0 : index
      %52 = vector.load %arg13[%c0_41, %c0_42] : memref<8x32xf32, #tpu.memory_space<vmem>>, vector<8x32xf32>
      tpu.vector_store %arg13[%c0_41, %c0_42], %51 {strides = array<i32>} : memref<8x32xf32, #tpu.memory_space<vmem>>, vector<8x32xf32>,
    } else {
    }
    %c0_31 = arith.constant 0 : index
    %c0_32 = arith.constant 0 : index
    %42 = vector.load %arg13[%c0_31, %c0_32] : memref<8x32xf32, #tpu.memory_space<vmem>>, vector<8x32xf32>
    %c0_33 = arith.constant 0 : index
    %c0_34 = arith.constant 0 : index
    %c0_35 = arith.constant 0 : index
    %43 = vector.load %arg9[%c0_33, %c0_34, %c0_35] : memref<1x8x32xf32, #tpu.memory_space<vmem>>, vector<1x8x32xf32>
    %44 = vector.shape_cast %43 : vector<1x8x32xf32> to vector<8x32xf32>
    %cst_36 = arith.constant dense<0.000000e+00> : vector<8x32xf32>
    %45 = tpu.matmul %38, %44, %cst_36 {dimension_numbers = #tpu.dot_dimension_numbers<[1], [0], [0], [1], [0, 0, 1, 1], [], []>} : vector<8x8xf32>, vector<8x32xf32>, vector<8x32xf32> -> vector<8x32xf32>
    %46 = arith.addf %42, %45 : vector<8x32xf32>
    %c0_37 = arith.constant 0 : index
    %c0_38 = arith.constant 0 : index
    %47 = vector.load %arg13[%c0_37, %c0_38] : memref<8x32xf32, #tpu.memory_space<vmem>>, vector<8x32xf32>
    tpu.vector_store %arg13[%c0_37, %c0_38], %46 {strides = array<i32>} : memref<8x32xf32, #tpu.memory_space<vmem>>, vector<8x32xf32>,
    %c3_i32 = arith.constant 3 : i32
    %48 = arith.cmpi eq, %arg1, %c3_i32 : i32
    %49 = arith.extui %48 : i1 to i32
    %c0_i32_39 = arith.constant 0 : i32
    %50 = arith.cmpi ne, %49, %c0_i32_39 : i32
    scf.if %50 {
      %c0_40 = arith.constant 0 : index
      %c0_41 = arith.constant 0 : index
      %51 = vector.load %arg13[%c0_40, %c0_41] : memref<8x32xf32, #tpu.memory_space<vmem>>, vector<8x32xf32>
      %c0_42 = arith.constant 0 : index
      %c0_43 = arith.constant 0 : index
      %52 = vector.load %arg10[%c0_42, %c0_43] : memref<1x32xf32, #tpu.memory_space<vmem>>, vector<1x32xf32>
      %53 = vector.broadcast %52 : vector<1x32xf32> to vector<8x32xf32>
      %54 = arith.addf %51, %53 : vector<8x32xf32>
      %c0_44 = arith.constant 0 : index
      %c0_45 = arith.constant 0 : index
      %c0_46 = arith.constant 0 : index
      %55 = vector.load %arg11[%c0_44, %c0_45, %c0_46] : memref<1x8x32xf32, #tpu.memory_space<vmem>>, vector<1x8x32xf32>
      %56 = vector.shape_cast %55 : vector<1x8x32xf32> to vector<8x32xf32>
      %57 = vector.shape_cast %54 : vector<8x32xf32> to vector<1x8x32xf32>
      tpu.vector_store %arg11[%c0_44, %c0_45, %c0_46], %57 {strides = array<i32>} : memref<1x8x32xf32, #tpu.memory_space<vmem>>, vector<1x8x32xf32>,
    } else {
    }
    return
  }
  func.func @transform_0(%arg0: i32, %arg1: i32) -> (i32, i32, i32) {
    %c0_i32 = arith.constant 0 : i32
    %c0_i32_0 = arith.constant 0 : i32
    %c0_i32_1 = arith.constant 0 : i32
    return %arg0, %c0_i32, %c0_i32_0 : i32, i32, i32
  }
  func.func @transform_1(%arg0: i32, %arg1: i32) -> (i32, i32, i32) {
    %c0_i32 = arith.constant 0 : i32
    %c0_i32_0 = arith.constant 0 : i32
    %c0_i32_1 = arith.constant 0 : i32
    return %arg1, %c0_i32, %c0_i32_0 : i32, i32, i32
  }
  func.func @transform_2(%arg0: i32, %arg1: i32) -> (i32, i32, i32) {
    %c0_i32 = arith.constant 0 : i32
    %c0_i32_0 = arith.constant 0 : i32
    %c0_i32_1 = arith.constant 0 : i32
    return %arg1, %c0_i32, %c0_i32_0 : i32, i32, i32
  }
  func.func @transform_3(%arg0: i32, %arg1: i32) -> (i32, i32, i32) {
    %c0_i32 = arith.constant 0 : i32
    %c0_i32_0 = arith.constant 0 : i32
    %c0_i32_1 = arith.constant 0 : i32
    return %arg1, %c0_i32, %c0_i32_0 : i32, i32, i32
  }
  func.func @transform_4(%arg0: i32, %arg1: i32) -> (i32, i32, i32) {
    %c0_i32 = arith.constant 0 : i32
    %c0_i32_0 = arith.constant 0 : i32
    %c0_i32_1 = arith.constant 0 : i32
    return %arg1, %c0_i32, %c0_i32_0 : i32, i32, i32
  }
  func.func @transform_5(%arg0: i32, %arg1: i32) -> (i32, i32, i32) {
    %c0_i32 = arith.constant 0 : i32
    %c0_i32_0 = arith.constant 0 : i32
    %c0_i32_1 = arith.constant 0 : i32
    return %arg1, %c0_i32, %c0_i32_0 : i32, i32, i32
  }
  func.func @transform_6(%arg0: i32, %arg1: i32) -> (i32, i32, i32) {
    %c0_i32 = arith.constant 0 : i32
    %c0_i32_0 = arith.constant 0 : i32
    %c0_i32_1 = arith.constant 0 : i32
    return %arg1, %c0_i32, %c0_i32_0 : i32, i32, i32
  }
  func.func @transform_7(%arg0: i32, %arg1: i32) -> (i32, i32, i32) {
    %c0_i32 = arith.constant 0 : i32
    %c0_i32_0 = arith.constant 0 : i32
    %c0_i32_1 = arith.constant 0 : i32
    return %arg1, %c0_i32, %c0_i32_0 : i32, i32, i32
  }
  func.func @transform_8(%arg0: i32, %arg1: i32) -> (i32, i32) {
    %c0_i32 = arith.constant 0 : i32
    %c0_i32_0 = arith.constant 0 : i32
    %c0_i32_1 = arith.constant 0 : i32
    return %c0_i32, %c0_i32_0 : i32, i32
  }
  func.func @transform_9(%arg0: i32, %arg1: i32) -> (i32, i32, i32) {
    %c0_i32 = arith.constant 0 : i32
    %c0_i32_0 = arith.constant 0 : i32
    %c0_i32_1 = arith.constant 0 : i32
    return %arg0, %c0_i32, %c0_i32_0 : i32, i32, i32
  }
  func.func @transform_10(%arg0: i32, %arg1: i32) -> (i32, i32, i32, i32) {
    %c0_i32 = arith.constant 0 : i32
    %c0_i32_0 = arith.constant 0 : i32
    %c0_i32_1 = arith.constant 0 : i32
    return %arg0, %arg1, %c0_i32, %c0_i32_0 : i32, i32, i32, i32
  }
}

</mosaic_0001>

<llo_original>
// kernel: tpu_custom_call.1
$region0: #{tpu_custom_call.1}
  #allocation0 [shape = 'u32[]', space=smem, size = 0x4, offset = 0x4, fixed_abs, tag = 'smem constant byte address 0x4 - core index']
  #allocation1 [shape = 'u32[72,128]{1,0:T(1,128)}', space=vmem, size = 0x9000, scoped, tag = 'internal scratch']
  #allocation2 [shape = 'f32[8,32]{1,0:T(8,128)}', space=vmem, size = 0x1000, scoped, tag = 'scratch operand']
  %s0 = inlined_call_operand.vmem [shape: f32[2,8,32], index: 0, kind: input, shape index: {}]
  %s1 = inlined_call_operand.vmem [shape: f32[4,32,8], index: 1, kind: input, shape index: {}]
  %s2 = inlined_call_operand.vmem [shape: f32[4,1,8], index: 2, kind: input, shape index: {}]
  %s3 = inlined_call_operand.vmem [shape: f32[4,32,8], index: 3, kind: input, shape index: {}]
  %s4 = inlined_call_operand.vmem [shape: f32[4,1,8], index: 4, kind: input, shape index: {}]
  %s5 = inlined_call_operand.vmem [shape: f32[4,32,8], index: 5, kind: input, shape index: {}]
  %s6 = inlined_call_operand.vmem [shape: f32[4,1,8], index: 6, kind: input, shape index: {}]
  %s7 = inlined_call_operand.vmem [shape: f32[4,8,32], index: 7, kind: input, shape index: {}]
  %s8 = inlined_call_operand.vmem [shape: f32[1,32], index: 8, kind: input, shape index: {}]
  %s9 = inlined_call_operand.hbm [shape: f32[2,8,32], index: 9, kind: output, shape index: {0}]
  %s10 = inlined_call_operand.hbm [shape: f32[2,4,8,8], index: 10, kind: output, shape index: {1}]
  %11 = xla_tuple %s9, %s10
  %s12 = sld [smem:[#allocation0]]
  $region85: #{tpu_custom_call.1} parent=0
    _
  %s14 = ssub.s32 1, %s12
  %s15 = scalar_select 0, %s14, %s12
  $region1: #{tpu_custom_call.1} parent=0
    #allocation3 [shape = 'u8[8192]{0}', space=vmem, size = 0x2000, scoped, tag = 'output window, operand 0']
    #allocation4 [shape = 's32[2]{0}', space=sflag, size = 0x8, scoped, tag = 'scoped memory for tpu_custom_call.1']
    #allocation5 [shape = 'u8[8192]{0}', space=vmem, size = 0x2000, scoped, tag = 'output window, operand 1']
    #allocation6 [shape = 's32[2]{0}', space=sflag, size = 0x8, scoped, tag = 'scoped memory for tpu_custom_call.1']
    %16 = vsyncpa [#allocation4], 0
    %s17 = scalar_lea.sflag [#allocation4], 1
    %18 = vsyncpa %s17, 0
    %19 = vsyncpa [#allocation6], 0
    %s20 = scalar_lea.sflag [#allocation6], 1
    %21 = vsyncpa %s20, 0
    loop: start=0, step=1, limit=10
    $region2: #{tpu_custom_call.1} parent=1 // loop_pre_header
      _
    $region3: #{tpu_custom_call.1} parent=1 // loop_header
      %s23 = sphi 0, %s27
      %p24 = scmp.ge.s32.totalorder %s23, 10
      %s30 = sphi 0, %s42
      %s31 = sphi 0, %s38
      %s32 = sphi 0, %s30
      %s33 = sphi 0, %s31
      %s34 = sphi 0, %s32
      %s35 = sphi 0, %s33
      %s45 = sphi 0, %s47
      %s48 = sphi 0, %s45
      %s49 = sphi 0, %s48
      %s65 = sphi 0, %s49
      %s71 = sphi 0, %s73
      %s74 = sphi 0, %s71
      %s75 = sphi 0, %s74
      %s91 = sphi 0, %s75
      %s97 = sphi 0, %s99
      %s100 = sphi 0, %s97
      %s101 = sphi 0, %s100
      %s117 = sphi 0, %s101
      %s123 = sphi 0, %s125
      %s126 = sphi 0, %s123
      %s127 = sphi 0, %s126
      %s143 = sphi 0, %s127
      %s149 = sphi 0, %s151
      %s152 = sphi 0, %s149
      %s153 = sphi 0, %s152
      %s169 = sphi 0, %s153
      %s175 = sphi 0, %s177
      %s178 = sphi 0, %s175
      %s179 = sphi 0, %s178
      %s195 = sphi 0, %s179
      %s201 = sphi 0, %s203
      %s204 = sphi 0, %s201
      %s205 = sphi 0, %s204
      %s221 = sphi 0, %s205
      %s227 = sphi 0, %s229
      %s230 = sphi 0, %s227
      %s231 = sphi 0, %s230
      %s247 = sphi 0, %s231
      %s251 = sphi 0, %s251
      %s253 = sphi 0, %s251
      %s254 = sphi 0, %s253
      %s268 = sphi 0, %s254
      %s274 = sphi 0, %s276
      %s277 = sphi 0, %s274
      %s278 = sphi 0, %s277
      %s294 = sphi 0, %s278
      %s302 = sphi 0, %s304
      %s305 = sphi 0, %s302
      %s306 = sphi 0, %s305
      %s322 = sphi 0, %s306
    $region4: #{tpu_custom_call.1} parent=1 // loop_header_branch
      %26 = sbr.rel (%p24) target = $region8
    $region5: #{tpu_custom_call.1} parent=1 // loop_body
      %s28 = ssub.s32 %s23, 1
      %s29 = ssub.s32 %s23, 2
      %s36 = sadd.s32 1, %s31
      %p37 = scmp.ge.s32.totalorder %s36, 4
      %s38 = scalar_select %p37, 0, %s36
      %s39 = sadd.s32 1, %s30
      %s40 = scalar_select %p37, %s39, %s30
      %p41 = scmp.ge.s32.totalorder %s40, 2
      %s42 = scalar_select %p41, 0, %s40
      %s43 = ssub.s32 %s30, %s42
      %p44 = scmp.eq.s32.totalorder %s43, 0
      %s46 = sadd.s32 %s45, 1
      %s47 = scalar_select %p44, %s45, %s46
      %p50 = pneg %p44
      %p51 = scmp.eq.s32.totalorder %s23, 7
      %p52 = por %p50, %p51
      %p53 = scmp.ne.s32.totalorder %s45, %s48
      %p54 = scmp.eq.s32.totalorder %s23, 0
      %p55 = por %p53, %p54
      %p56 = scmp.ne.s32.totalorder %s45, %s48
      %p57 = scmp.eq.s32.totalorder %s28, 7
      %p58 = por %p56, %p57
      %p59 = scmp.ne.s32.totalorder %s48, %s49
      %p60 = scmp.eq.s32.totalorder %s28, 0
      %p61 = por %p59, %p60
      %p62 = scmp.ne.s32.totalorder %s48, %s49
      %p63 = scmp.eq.s32.totalorder %s29, 7
      %p64 = por %p62, %p63
      %p66 = scmp.ne.s32.totalorder %s49, %s65
      %p67 = scmp.eq.s32.totalorder %s29, 0
      %p68 = por %p66, %p67
      %s69 = ssub.s32 %s31, %s38
      %p70 = scmp.eq.s32.totalorder %s69, 0
      %s72 = sadd.s32 %s71, 1
      %s73 = scalar_select %p70, %s71, %s72
      %p76 = pneg %p70
      %p77 = scmp.eq.s32.totalorder %s23, 7
      %p78 = por %p76, %p77
      %p79 = scmp.ne.s32.totalorder %s71, %s74
      %p80 = scmp.eq.s32.totalorder %s23, 0
      %p81 = por %p79, %p80
      %p82 = scmp.ne.s32.totalorder %s71, %s74
      %p83 = scmp.eq.s32.totalorder %s28, 7
      %p84 = por %p82, %p83
      %p85 = scmp.ne.s32.totalorder %s74, %s75
      %p86 = scmp.eq.s32.totalorder %s28, 0
      %p87 = por %p85, %p86
      %p88 = scmp.ne.s32.totalorder %s74, %s75
      %p89 = scmp.eq.s32.totalorder %s29, 7
      %p90 = por %p88, %p89
      %p92 = scmp.ne.s32.totalorder %s75, %s91
      %p93 = scmp.eq.s32.totalorder %s29, 0
      %p94 = por %p92, %p93
      %s95 = ssub.s32 %s31, %s38
      %p96 = scmp.eq.s32.totalorder %s95, 0
      %s98 = sadd.s32 %s97, 1
      %s99 = scalar_select %p96, %s97, %s98
      %p102 = pneg %p96
      %p103 = scmp.eq.s32.totalorder %s23, 7
      %p104 = por %p102, %p103
      %p105 = scmp.ne.s32.totalorder %s97, %s100
      %p106 = scmp.eq.s32.totalorder %s23, 0
      %p107 = por %p105, %p106
      %p108 = scmp.ne.s32.totalorder %s97, %s100
      %p109 = scmp.eq.s32.totalorder %s28, 7
      %p110 = por %p108, %p109
      %p111 = scmp.ne.s32.totalorder %s100, %s101
      %p112 = scmp.eq.s32.totalorder %s28, 0
      %p113 = por %p111, %p112
      %p114 = scmp.ne.s32.totalorder %s100, %s101
      %p115 = scmp.eq.s32.totalorder %s29, 7
      %p116 = por %p114, %p115
      %p118 = scmp.ne.s32.totalorder %s101, %s117
      %p119 = scmp.eq.s32.totalorder %s29, 0
      %p120 = por %p118, %p119
      %s121 = ssub.s32 %s31, %s38
      %p122 = scmp.eq.s32.totalorder %s121, 0
      %s124 = sadd.s32 %s123, 1
      %s125 = scalar_select %p122, %s123, %s124
      %p128 = pneg %p122
      %p129 = scmp.eq.s32.totalorder %s23, 7
      %p130 = por %p128, %p129
      %p131 = scmp.ne.s32.totalorder %s123, %s126
      %p132 = scmp.eq.s32.totalorder %s23, 0
      %p133 = por %p131, %p132
      %p134 = scmp.ne.s32.totalorder %s123, %s126
      %p135 = scmp.eq.s32.totalorder %s28, 7
      %p136 = por %p134, %p135
      %p137 = scmp.ne.s32.totalorder %s126, %s127
      %p138 = scmp.eq.s32.totalorder %s28, 0
      %p139 = por %p137, %p138
      %p140 = scmp.ne.s32.totalorder %s126, %s127
      %p141 = scmp.eq.s32.totalorder %s29, 7
      %p142 = por %p140, %p141
      %p144 = scmp.ne.s32.totalorder %s127, %s143
      %p145 = scmp.eq.s32.totalorder %s29, 0
      %p146 = por %p144, %p145
      %s147 = ssub.s32 %s31, %s38
      %p148 = scmp.eq.s32.totalorder %s147, 0
      %s150 = sadd.s32 %s149, 1
      %s151 = scalar_select %p148, %s149, %s150
      %p154 = pneg %p148
      %p155 = scmp.eq.s32.totalorder %s23, 7
      %p156 = por %p154, %p155
      %p157 = scmp.ne.s32.totalorder %s149, %s152
      %p158 = scmp.eq.s32.totalorder %s23, 0
      %p159 = por %p157, %p158
      %p160 = scmp.ne.s32.totalorder %s149, %s152
      %p161 = scmp.eq.s32.totalorder %s28, 7
      %p162 = por %p160, %p161
      %p163 = scmp.ne.s32.totalorder %s152, %s153
      %p164 = scmp.eq.s32.totalorder %s28, 0
      %p165 = por %p163, %p164
      %p166 = scmp.ne.s32.totalorder %s152, %s153
      %p167 = scmp.eq.s32.totalorder %s29, 7
      %p168 = por %p166, %p167
      %p170 = scmp.ne.s32.totalorder %s153, %s169
      %p171 = scmp.eq.s32.totalorder %s29, 0
      %p172 = por %p170, %p171
      %s173 = ssub.s32 %s31, %s38
      %p174 = scmp.eq.s32.totalorder %s173, 0
      %s176 = sadd.s32 %s175, 1
      %s177 = scalar_select %p174, %s175, %s176
      %p180 = pneg %p174
      %p181 = scmp.eq.s32.totalorder %s23, 7
      %p182 = por %p180, %p181
      %p183 = scmp.ne.s32.totalorder %s175, %s178
      %p184 = scmp.eq.s32.totalorder %s23, 0
      %p185 = por %p183, %p184
      %p186 = scmp.ne.s32.totalorder %s175, %s178
      %p187 = scmp.eq.s32.totalorder %s28, 7
      %p188 = por %p186, %p187
      %p189 = scmp.ne.s32.totalorder %s178, %s179
      %p190 = scmp.eq.s32.totalorder %s28, 0
      %p191 = por %p189, %p190
      %p192 = scmp.ne.s32.totalorder %s178, %s179
      %p193 = scmp.eq.s32.totalorder %s29, 7
      %p194 = por %p192, %p193
      %p196 = scmp.ne.s32.totalorder %s179, %s195
      %p197 = scmp.eq.s32.totalorder %s29, 0
      %p198 = por %p196, %p197
      %s199 = ssub.s32 %s31, %s38
      %p200 = scmp.eq.s32.totalorder %s199, 0
      %s202 = sadd.s32 %s201, 1
      %s203 = scalar_select %p200, %s201, %s202
      %p206 = pneg %p200
      %p207 = scmp.eq.s32.totalorder %s23, 7
      %p208 = por %p206, %p207
      %p209 = scmp.ne.s32.totalorder %s201, %s204
      %p210 = scmp.eq.s32.totalorder %s23, 0
      %p211 = por %p209, %p210
      %p212 = scmp.ne.s32.totalorder %s201, %s204
      %p213 = scmp.eq.s32.totalorder %s28, 7
      %p214 = por %p212, %p213
      %p215 = scmp.ne.s32.totalorder %s204, %s205
      %p216 = scmp.eq.s32.totalorder %s28, 0
      %p217 = por %p215, %p216
      %p218 = scmp.ne.s32.totalorder %s204, %s205
      %p219 = scmp.eq.s32.totalorder %s29, 7
      %p220 = por %p218, %p219
      %p222 = scmp.ne.s32.totalorder %s205, %s221
      %p223 = scmp.eq.s32.totalorder %s29, 0
      %p224 = por %p222, %p223
      %s225 = ssub.s32 %s31, %s38
      %p226 = scmp.eq.s32.totalorder %s225, 0
      %s228 = sadd.s32 %s227, 1
      %s229 = scalar_select %p226, %s227, %s228
      %p232 = pneg %p226
      %p233 = scmp.eq.s32.totalorder %s23, 7
      %p234 = por %p232, %p233
      %p235 = scmp.ne.s32.totalorder %s227, %s230
      %p236 = scmp.eq.s32.totalorder %s23, 0
      %p237 = por %p235, %p236
      %p238 = scmp.ne.s32.totalorder %s227, %s230
      %p239 = scmp.eq.s32.totalorder %s28, 7
      %p240 = por %p238, %p239
      %p241 = scmp.ne.s32.totalorder %s230, %s231
      %p242 = scmp.eq.s32.totalorder %s28, 0
      %p243 = por %p241, %p242
      %p244 = scmp.ne.s32.totalorder %s230, %s231
      %p245 = scmp.eq.s32.totalorder %s29, 7
      %p246 = por %p244, %p245
      %p248 = scmp.ne.s32.totalorder %s231, %s247
      %p249 = scmp.eq.s32.totalorder %s29, 0
      %p250 = por %p248, %p249
      %s252 = sadd.s32 %s251, 1
      %p255 = scmp.eq.s32.totalorder %s23, 7
      %p256 = scmp.ne.s32.totalorder %s251, %s253
      %p257 = scmp.eq.s32.totalorder %s23, 0
      %p258 = por %p256, %p257
      %p259 = scmp.ne.s32.totalorder %s251, %s253
      %p260 = scmp.eq.s32.totalorder %s28, 7
      %p261 = por %p259, %p260
      %p262 = scmp.ne.s32.totalorder %s253, %s254
      %p263 = scmp.eq.s32.totalorder %s28, 0
      %p264 = por %p262, %p263
      %p265 = scmp.ne.s32.totalorder %s253, %s254
      %p266 = scmp.eq.s32.totalorder %s29, 7
      %p267 = por %p265, %p266
      %p269 = scmp.ne.s32.totalorder %s254, %s268
      %p270 = scmp.eq.s32.totalorder %s29, 0
      %p271 = por %p269, %p270
      %s272 = ssub.s32 %s30, %s42
      %p273 = scmp.eq.s32.totalorder %s272, 0
      %s275 = sadd.s32 %s274, 1
      %s276 = scalar_select %p273, %s274, %s275
      %p279 = pneg %p273
      %p280 = scmp.eq.s32.totalorder %s23, 7
      %p281 = por %p279, %p280
      %p282 = scmp.ne.s32.totalorder %s274, %s277
      %p283 = scmp.eq.s32.totalorder %s23, 0
      %p284 = por %p282, %p283
      %p285 = scmp.ne.s32.totalorder %s274, %s277
      %p286 = scmp.eq.s32.totalorder %s28, 7
      %p287 = por %p285, %p286
      %p288 = scmp.ne.s32.totalorder %s277, %s278
      %p289 = scmp.eq.s32.totalorder %s28, 0
      %p290 = por %p288, %p289
      %p291 = scmp.ne.s32.totalorder %s277, %s278
      %p292 = scmp.eq.s32.totalorder %s29, 7
      %p293 = por %p291, %p292
      %p295 = scmp.ne.s32.totalorder %s278, %s294
      %p296 = scmp.eq.s32.totalorder %s29, 0
      %p297 = por %p295, %p296
      %s298 = ssub.s32 %s30, %s42
      %s299 = ssub.s32 %s31, %s38
      %s300 = sor.u32 %s298, %s299
      %p301 = scmp.eq.s32.totalorder %s300, 0
      %s303 = sadd.s32 %s302, 1
      %s304 = scalar_select %p301, %s302, %s303
      %p307 = pneg %p301
      %p308 = scmp.eq.s32.totalorder %s23, 7
      %p309 = por %p307, %p308
      %p310 = scmp.ne.s32.totalorder %s302, %s305
      %p311 = scmp.eq.s32.totalorder %s23, 0
      %p312 = por %p310, %p311
      %p313 = scmp.ne.s32.totalorder %s302, %s305
      %p314 = scmp.eq.s32.totalorder %s28, 7
      %p315 = por %p313, %p314
      %p316 = scmp.ne.s32.totalorder %s305, %s306
      %p317 = scmp.eq.s32.totalorder %s28, 0
      %p318 = por %p316, %p317
      %p319 = scmp.ne.s32.totalorder %s305, %s306
      %p320 = scmp.eq.s32.totalorder %s29, 7
      %p321 = por %p319, %p320
      %p323 = scmp.ne.s32.totalorder %s306, %s322
      %p324 = scmp.eq.s32.totalorder %s29, 0
      %p325 = por %p323, %p324
      %p326 = scmp.le.s32.totalorder 1, %s23
      %p327 = scmp.lt.s32.totalorder %s23, 9
      %p328 = pnand %p326, %p327
      %p329 = pneg %p328
      // Predicated region
      $region9: #{tpu_custom_call.1} parent=5 // pred_check
        _
      $region10: #{tpu_custom_call.1} parent=5 // pred_check_branch
        %331 = sbr.rel (%p328) target = $region12
      $region11: #{tpu_custom_call.1} parent=5 // pred_region
        %s332 = ssub.s32 %s23, 1
        // Predicated region
        $region13: #{tpu_custom_call.1} parent=11 // pred_check
          %p333 = pneg %p264
        $region14: #{tpu_custom_call.1} parent=11 // pred_check_branch
          %335 = sbr.rel (%p333) target = $region16
        $region15: #{tpu_custom_call.1} parent=11 // pred_region
          _
        $region16: #{tpu_custom_call.1} parent=11 // pred_fallthru
          _
      $region12: #{tpu_custom_call.1} parent=5 // pred_fallthru
        _
      %p336 = scmp.lt.s32.totalorder %s23, 8
      // Predicated region
      $region17: #{tpu_custom_call.1} parent=5 // pred_check
        %p337 = pneg %p336
      $region18: #{tpu_custom_call.1} parent=5 // pred_check_branch
        %339 = sbr.rel (%p337) target = $region20
      $region19: #{tpu_custom_call.1} parent=5 // pred_region
        // Predicated region
        $region21: #{tpu_custom_call.1} parent=19 // pred_check
          %p340 = pneg %p55
        $region22: #{tpu_custom_call.1} parent=19 // pred_check_branch
          %342 = sbr.rel (%p340) target = $region24
        $region23: #{tpu_custom_call.1} parent=19 // pred_region
          %p343 = scmp.lt.s32.totalorder %s30, 1
          %s344 = scalar_select %p343, %s30, 1
          %s345 = smul.addr %s344, 8
          %s346 = scalar_lea.vmem %s0, %s345
        $region24: #{tpu_custom_call.1} parent=19 // pred_fallthru
          _
        // Predicated region
        $region25: #{tpu_custom_call.1} parent=19 // pred_check
          %p347 = pneg %p81
        $region26: #{tpu_custom_call.1} parent=19 // pred_check_branch
          %349 = sbr.rel (%p347) target = $region28
        $region27: #{tpu_custom_call.1} parent=19 // pred_region
          %p350 = scmp.lt.s32.totalorder %s31, 3
          %s351 = scalar_select %p350, %s31, 3
          %s352 = smul.addr %s351, 4
          %s353 = smul.addr %s352, 8
          %s354 = scalar_lea.vmem %s1, %s353
        $region28: #{tpu_custom_call.1} parent=19 // pred_fallthru
          _
        // Predicated region
        $region29: #{tpu_custom_call.1} parent=19 // pred_check
          %p355 = pneg %p107
        $region30: #{tpu_custom_call.1} parent=19 // pred_check_branch
          %357 = sbr.rel (%p355) target = $region32
        $region31: #{tpu_custom_call.1} parent=19 // pred_region
          %p358 = scmp.lt.s32.totalorder %s31, 3
          %s359 = scalar_select %p358, %s31, 3
          %s360 = scalar_lea.vmem %s2, %s359
        $region32: #{tpu_custom_call.1} parent=19 // pred_fallthru
          _
        // Predicated region
        $region33: #{tpu_custom_call.1} parent=19 // pred_check
          %p361 = pneg %p133
        $region34: #{tpu_custom_call.1} parent=19 // pred_check_branch
          %363 = sbr.rel (%p361) target = $region36
        $region35: #{tpu_custom_call.1} parent=19 // pred_region
          %p364 = scmp.lt.s32.totalorder %s31, 3
          %s365 = scalar_select %p364, %s31, 3
          %s366 = smul.addr %s365, 4
          %s367 = smul.addr %s366, 8
          %s368 = scalar_lea.vmem %s3, %s367
        $region36: #{tpu_custom_call.1} parent=19 // pred_fallthru
          _
        // Predicated region
        $region37: #{tpu_custom_call.1} parent=19 // pred_check
          %p369 = pneg %p159
        $region38: #{tpu_custom_call.1} parent=19 // pred_check_branch
          %371 = sbr.rel (%p369) target = $region40
        $region39: #{tpu_custom_call.1} parent=19 // pred_region
          %p372 = scmp.lt.s32.totalorder %s31, 3
          %s373 = scalar_select %p372, %s31, 3
          %s374 = scalar_lea.vmem %s4, %s373
        $region40: #{tpu_custom_call.1} parent=19 // pred_fallthru
          _
        // Predicated region
        $region41: #{tpu_custom_call.1} parent=19 // pred_check
          %p375 = pneg %p185
        $region42: #{tpu_custom_call.1} parent=19 // pred_check_branch
          %377 = sbr.rel (%p375) target = $region44
        $region43: #{tpu_custom_call.1} parent=19 // pred_region
          %p378 = scmp.lt.s32.totalorder %s31, 3
          %s379 = scalar_select %p378, %s31, 3
          %s380 = smul.addr %s379, 4
          %s381 = smul.addr %s380, 8
          %s382 = scalar_lea.vmem %s5, %s381
        $region44: #{tpu_custom_call.1} parent=19 // pred_fallthru
          _
        // Predicated region
        $region45: #{tpu_custom_call.1} parent=19 // pred_check
          %p383 = pneg %p211
        $region46: #{tpu_custom_call.1} parent=19 // pred_check_branch
          %385 = sbr.rel (%p383) target = $region48
        $region47: #{tpu_custom_call.1} parent=19 // pred_region
          %p386 = scmp.lt.s32.totalorder %s31, 3
          %s387 = scalar_select %p386, %s31, 3
          %s388 = scalar_lea.vmem %s6, %s387
        $region48: #{tpu_custom_call.1} parent=19 // pred_fallthru
          _
        // Predicated region
        $region49: #{tpu_custom_call.1} parent=19 // pred_check
          %p389 = pneg %p237
        $region50: #{tpu_custom_call.1} parent=19 // pred_check_branch
          %391 = sbr.rel (%p389) target = $region52
        $region51: #{tpu_custom_call.1} parent=19 // pred_region
          %p392 = scmp.lt.s32.totalorder %s31, 3
          %s393 = scalar_select %p392, %s31, 3
          %s394 = smul.addr %s393, 8
          %s395 = scalar_lea.vmem %s7, %s394
        $region52: #{tpu_custom_call.1} parent=19 // pred_fallthru
          _
      $region20: #{tpu_custom_call.1} parent=5 // pred_fallthru
        _
      %p396 = scmp.le.s32.totalorder 1, %s23
      %p397 = scmp.lt.s32.totalorder %s23, 9
      %p398 = pnand %p396, %p397
      %p399 = pneg %p398
      // Predicated region
      $region53: #{tpu_custom_call.1} parent=5 // pred_check
        _
      $region54: #{tpu_custom_call.1} parent=5 // pred_check_branch
        %401 = sbr.rel (%p398) target = $region56
      $region55: #{tpu_custom_call.1} parent=5 // pred_region
        %s402 = ssub.s32 %s23, 1
        %p403 = scmp.lt.s32.totalorder %s32, 1
        %s404 = scalar_select %p403, %s32, 1
        %s405 = smul.addr %s404, 8
        %s406 = scalar_lea.vmem %s0, %s405
        %p407 = pneg %p61
        %p408 = pneg %p58
        %p409 = scmp.lt.s32.totalorder %s33, 3
        %s410 = scalar_select %p409, %s33, 3
        %s411 = smul.addr %s410, 4
        %s412 = smul.addr %s411, 8
        %s413 = scalar_lea.vmem %s1, %s412
        %p414 = pneg %p87
        %p415 = pneg %p84
        %p416 = scmp.lt.s32.totalorder %s33, 3
        %s417 = scalar_select %p416, %s33, 3
        %s418 = scalar_lea.vmem %s2, %s417
        %p419 = pneg %p113
        %p420 = pneg %p110
        %p421 = scmp.lt.s32.totalorder %s33, 3
        %s422 = scalar_select %p421, %s33, 3
        %s423 = smul.addr %s422, 4
        %s424 = smul.addr %s423, 8
        %s425 = scalar_lea.vmem %s3, %s424
        %p426 = pneg %p139
        %p427 = pneg %p136
        %p428 = scmp.lt.s32.totalorder %s33, 3
        %s429 = scalar_select %p428, %s33, 3
        %s430 = scalar_lea.vmem %s4, %s429
        %p431 = pneg %p165
        %p432 = pneg %p162
        %p433 = scmp.lt.s32.totalorder %s33, 3
        %s434 = scalar_select %p433, %s33, 3
        %s435 = smul.addr %s434, 4
        %s436 = smul.addr %s435, 8
        %s437 = scalar_lea.vmem %s5, %s436
        %p438 = pneg %p191
        %p439 = pneg %p188
        %p440 = scmp.lt.s32.totalorder %s33, 3
        %s441 = scalar_select %p440, %s33, 3
        %s442 = scalar_lea.vmem %s6, %s441
        %p443 = pneg %p217
        %p444 = pneg %p214
        %p445 = scmp.lt.s32.totalorder %s33, 3
        %s446 = scalar_select %p445, %s33, 3
        %s447 = smul.addr %s446, 8
        %s448 = scalar_lea.vmem %s7, %s447
        %p449 = pneg %p243
        %p450 = pneg %p240
        %p451 = pneg %p264
        %p452 = pneg %p261
        %p453 = pneg %p290
        %p454 = pneg %p287
        %s455 = sand.u32 %s277, 1
        %s456 = scalar_lea.sflag [#allocation4], %s455
        %s457 = sand.u32 %s277, 1
        %s458 = smul.addr %s457, 8
        %s459 = scalar_lea.vmem [#allocation3], %s458
        %p460 = pneg %p318
        %p461 = pneg %p315
        %s462 = sand.u32 %s305, 1
        %s463 = scalar_lea.sflag [#allocation6], %s462
        %s464 = sand.u32 %s305, 1
        %s465 = smul.addr %s464, 8
        %s466 = scalar_lea.vmem [#allocation5], %s465
        %p467 = scmp.lt.s32.totalorder %s32, 1
        %s468 = scalar_select %p467, %s32, 1
        %s469 = smul.addr %s468, 8
        %s470 = scalar_lea.vmem %s0, %s469
        %p471 = scmp.lt.s32.totalorder %s33, 3
        %s472 = scalar_select %p471, %s33, 3
        %s473 = smul.addr %s472, 4
        %s474 = smul.addr %s473, 8
        %s475 = scalar_lea.vmem %s1, %s474
        %p476 = scmp.lt.s32.totalorder %s33, 3
        %s477 = scalar_select %p476, %s33, 3
        %s478 = scalar_lea.vmem %s2, %s477
        %p479 = scmp.lt.s32.totalorder %s33, 3
        %s480 = scalar_select %p479, %s33, 3
        %s481 = smul.addr %s480, 4
        %s482 = smul.addr %s481, 8
        %s483 = scalar_lea.vmem %s3, %s482
        %p484 = scmp.lt.s32.totalorder %s33, 3
        %s485 = scalar_select %p484, %s33, 3
        %s486 = scalar_lea.vmem %s4, %s485
        %p487 = scmp.lt.s32.totalorder %s33, 3
        %s488 = scalar_select %p487, %s33, 3
        %s489 = smul.addr %s488, 4
        %s490 = smul.addr %s489, 8
        %s491 = scalar_lea.vmem %s5, %s490
        %p492 = scmp.lt.s32.totalorder %s33, 3
        %s493 = scalar_select %p492, %s33, 3
        %s494 = scalar_lea.vmem %s6, %s493
        %p495 = scmp.lt.s32.totalorder %s33, 3
        %s496 = scalar_select %p495, %s33, 3
        %s497 = smul.addr %s496, 8
        %s498 = scalar_lea.vmem %s7, %s497
        %v499 = vld [vmem:[%s470] sm:$0xff]
        %v500 = vld [vmem:[%s475] sm:$0xff]
        %v501 = vld [vmem:[%s475 + $0x8] sm:$0xff]
        %v502 = vld [vmem:[%s475 + $0x10] sm:$0xff]
        %v503 = vld [vmem:[%s475 + $0x18] sm:$0xff]
        %v504 = vld [vmem:[%s478] sm:$0x1]
        %v506 = vperm.slane %v504, 0
        %vm508 = vcmask 261120
        %v510 = vsel %vm508, %v499, 0
        %512 = vmatpush.msra.mxu0 0.0
        %513 = vmatpush.msra.mxu0 0.0
        %514 = vmatpush.msra.mxu0 0.0
        %515 = vmatpush.msra.mxu0 0.0
        %516 = vmatpush.msra.mxu0 0.0
        %517 = vmatpush.msra.mxu0 0.0
        %518 = vmatpush.msra.mxu0 0.0
        %519 = vmatpush.msra.mxu0 0.0
        %520 = vmatpush.msra.mxu0 0.0
        %521 = vmatpush.msra.mxu0 0.0
        %522 = vmatpush.msra.mxu0 0.0
        %523 = vmatpush.msra.mxu0 0.0
        %524 = vmatpush.msra.mxu0 %v503
        %525 = vmatpush.msra.mxu0 %v502
        %526 = vmatpush.msra.mxu0 %v501
        %527 = vmatpush.msra.mxu0 %v500
        %528 = vmatmul.f32.gmra.mxu0 %v510
        %v529 = vpop.f32.mrf.mxu0
        %v530 = vadd.f32 %v506, %v529
        %531 = vdwg.mxu0
        %v532 = vld [vmem:[%s483] sm:$0xff]
        %v533 = vld [vmem:[%s483 + $0x8] sm:$0xff]
        %v534 = vld [vmem:[%s483 + $0x10] sm:$0xff]
        %v535 = vld [vmem:[%s483 + $0x18] sm:$0xff]
        %v536 = vld [vmem:[%s486] sm:$0x1]
        %v538 = vperm.slane %v536, 0
        %540 = vmatpush.msra.mxu0 0.0
        %541 = vmatpush.msra.mxu0 0.0
        %542 = vmatpush.msra.mxu0 0.0
        %543 = vmatpush.msra.mxu0 0.0
        %544 = vmatpush.msra.mxu0 0.0
        %545 = vmatpush.msra.mxu0 0.0
        %546 = vmatpush.msra.mxu0 0.0
        %547 = vmatpush.msra.mxu0 0.0
        %548 = vmatpush.msra.mxu0 0.0
        %549 = vmatpush.msra.mxu0 0.0
        %550 = vmatpush.msra.mxu0 0.0
        %551 = vmatpush.msra.mxu0 0.0
        %552 = vmatpush.msra.mxu0 %v535
        %553 = vmatpush.msra.mxu0 %v534
        %554 = vmatpush.msra.mxu0 %v533
        %555 = vmatpush.msra.mxu0 %v532
        %556 = vmatmul.f32.gmra.mxu0 %v510
        %v557 = vpop.f32.mrf.mxu0
        %v558 = vadd.f32 %v538, %v557
        %559 = vdwg.mxu0
        %v560 = vld [vmem:[%s491] sm:$0xff]
        %v561 = vld [vmem:[%s491 + $0x8] sm:$0xff]
        %v562 = vld [vmem:[%s491 + $0x10] sm:$0xff]
        %v563 = vld [vmem:[%s491 + $0x18] sm:$0xff]
        %v564 = vld [vmem:[%s494] sm:$0x1]
        %v566 = vperm.slane %v564, 0
        %568 = vmatpush.msra.mxu0 0.0
        %569 = vmatpush.msra.mxu0 0.0
        %570 = vmatpush.msra.mxu0 0.0
        %571 = vmatpush.msra.mxu0 0.0
        %572 = vmatpush.msra.mxu0 0.0
        %573 = vmatpush.msra.mxu0 0.0
        %574 = vmatpush.msra.mxu0 0.0
        %575 = vmatpush.msra.mxu0 0.0
        %576 = vmatpush.msra.mxu0 0.0
        %577 = vmatpush.msra.mxu0 0.0
        %578 = vmatpush.msra.mxu0 0.0
        %579 = vmatpush.msra.mxu0 0.0
        %580 = vmatpush.msra.mxu0 %v563
        %581 = vmatpush.msra.mxu0 %v562
        %582 = vmatpush.msra.mxu0 %v561
        %583 = vmatpush.msra.mxu0 %v560
        %584 = vmatmul.f32.gmra.mxu0 %v510
        %v585 = vpop.f32.mrf.mxu0
        %v586 = vadd.f32 %v566, %v585
        %587 = vdwg.mxu0
        %vm588 = vcmask 64512
        %v590 = vsel %vm588, %v530, 0
        %v593 = vsel %vm588, %v558, 0
        %595 = vmatpush.xpose.msra.mxu0 0.0
        %596 = vmatpush.xpose.msra.mxu0 0.0
        %597 = vmatpush.xpose.msra.mxu0 0.0
        %598 = vmatpush.xpose.msra.mxu0 0.0
        %599 = vmatpush.xpose.msra.mxu0 0.0
        %600 = vmatpush.xpose.msra.mxu0 0.0
        %601 = vmatpush.xpose.msra.mxu0 0.0
        %602 = vmatpush.xpose.msra.mxu0 0.0
        %603 = vmatpush.xpose.msra.mxu0 0.0
        %604 = vmatpush.xpose.msra.mxu0 0.0
        %605 = vmatpush.xpose.msra.mxu0 0.0
        %606 = vmatpush.xpose.msra.mxu0 0.0
        %607 = vmatpush.xpose.msra.mxu0 0.0
        %608 = vmatpush.xpose.msra.mxu0 0.0
        %609 = vmatpush.xpose.msra.mxu0 0.0
        %610 = vmatpush.xpose.msra.mxu0 %v593
        %611 = vmatmul.f32.gmra.mxu0 %v590
        %v612 = vpop.f32.mrf.mxu0
        %v613 = vadd.f32 0.0, %v612
        %614 = vdwg.mxu0
        %v615 = vsel %vm588, %v613, -inf
        %616 = vmax.xlane.f32.xlu0 %v615
        %v617 = vpop.xlane.xlu0 %616
        %v618 = vsub.f32 %v613, %v617
        %v619 = vmul.f32 %v618, 1.442695
        %v620 = vpow.pop %v619
        %v621 = vsel %vm588, %v620, 0.0
        %622 = vadd.xlane.f32.xlu0 %v621
        %v623 = vpop.xlane.xlu0 %622
        %v624 = vrcp.pop %v623
        %v625 = vmul.f32 %v623, %v624
        %v626 = vsub.f32 1.0, %v625
        %v627 = vmul.f32 %v624, %v626
        %v628 = vadd.f32 %v624, %v627
        %vm629 = vweird.f32 %v623
        %vm630 = vweird.f32 %v624
        %vm631 = vmor %vm629, %vm630
        %v632 = vsel %vm631, %v624, %v628
        %v633 = vand.u32 2147483647, %v623
        %vm634 = vcmp.eq.f32.partialorder %v633, 8.507059e+37
        %v635 = vand.u32 %v623, 2147483648
        %v636 = vor.u32 1.1754944e-38, %v635
        %v637 = vsel %vm634, %v636, %v632
        %v638 = vmul.f32 %v620, %v637
        %639 = vst.msk [vmem:[%s466] sm:$0xff] %vm588, %v638
        %v641 = vsel %vm588, %v638, 0
        %643 = vmatpush.msra.mxu0 0.0
        %644 = vmatpush.msra.mxu0 0.0
        %645 = vmatpush.msra.mxu0 0.0
        %646 = vmatpush.msra.mxu0 0.0
        %647 = vmatpush.msra.mxu0 0.0
        %648 = vmatpush.msra.mxu0 0.0
        %649 = vmatpush.msra.mxu0 0.0
        %650 = vmatpush.msra.mxu0 0.0
        %651 = vmatpush.msra.mxu0 0.0
        %652 = vmatpush.msra.mxu0 0.0
        %653 = vmatpush.msra.mxu0 0.0
        %654 = vmatpush.msra.mxu0 0.0
        %655 = vmatpush.msra.mxu0 0.0
        %656 = vmatpush.msra.mxu0 0.0
        %657 = vmatpush.msra.mxu0 0.0
        %658 = vmatpush.msra.mxu0 %v586
        %659 = vmatmul.f32.gmra.mxu0 %v641
        %v660 = vpop.f32.mrf.mxu0
        %v661 = vadd.f32 0.0, %v660
        %662 = vdwg.mxu0
        %p663 = scmp.eq.s32.totalorder %s33, 0
        // Predicated region
        $region57: #{tpu_custom_call.1} parent=55 // pred_check
          %p664 = pneg %p663
        $region58: #{tpu_custom_call.1} parent=55 // pred_check_branch
          %666 = sbr.rel (%p664) target = $region60
        $region59: #{tpu_custom_call.1} parent=55 // pred_region
          %667 = vst.msk [vmem:[#allocation2] sm:$0xff] %vm508, 0.0
        $region60: #{tpu_custom_call.1} parent=55 // pred_fallthru
          _
        %v668 = vld [vmem:[#allocation2] sm:$0xff]
        %v669 = vld [vmem:[%s498] sm:$0xff]
        %v671 = vsel %vm588, %v661, 0
        %673 = vmatpush.msra.mxu0 0.0
        %674 = vmatpush.msra.mxu0 0.0
        %675 = vmatpush.msra.mxu0 0.0
        %676 = vmatpush.msra.mxu0 0.0
        %677 = vmatpush.msra.mxu0 0.0
        %678 = vmatpush.msra.mxu0 0.0
        %679 = vmatpush.msra.mxu0 0.0
        %680 = vmatpush.msra.mxu0 0.0
        %681 = vmatpush.msra.mxu0 0.0
        %682 = vmatpush.msra.mxu0 0.0
        %683 = vmatpush.msra.mxu0 0.0
        %684 = vmatpush.msra.mxu0 0.0
        %685 = vmatpush.msra.mxu0 0.0
        %686 = vmatpush.msra.mxu0 0.0
        %687 = vmatpush.msra.mxu0 0.0
        %688 = vmatpush.msra.mxu0 %v669
        %689 = vmatmul.f32.gmra.mxu0 %v671
        %v690 = vpop.f32.mrf.mxu0
        %v691 = vadd.f32 0.0, %v690
        %692 = vdwg.mxu0
        %v693 = vadd.f32 %v668, %v691
        %694 = vst.msk [vmem:[#allocation2] sm:$0xff] %vm508, %v693
        %p695 = scmp.eq.s32.totalorder %s33, 3
        // Predicated region
        $region61: #{tpu_custom_call.1} parent=55 // pred_check
          %p696 = pneg %p695
        $region62: #{tpu_custom_call.1} parent=55 // pred_check_branch
          %698 = sbr.rel (%p696) target = $region64
        $region63: #{tpu_custom_call.1} parent=55 // pred_region
          %v699 = vld [vmem:[#allocation2] sm:$0xff]
          %v700 = vld [vmem:[%s8] sm:$0x1]
          %v702 = vperm.slane %v700, 0
          %v704 = vadd.f32 %v699, %v702
          %705 = vst.msk [vmem:[%s459] sm:$0xff] %vm508, %v704
        $region64: #{tpu_custom_call.1} parent=55 // pred_fallthru
          _
        %s706 = sand.u32 %s277, 1
        %s707 = scalar_lea.sflag [#allocation4], %s706
        %s708 = sand.u32 %s277, 1
        %s709 = smul.addr %s708, 8
        %s710 = scalar_lea.vmem [#allocation3], %s709
        %s711 = sand.u32 %s305, 1
        %s712 = scalar_lea.sflag [#allocation6], %s711
        %s713 = sand.u32 %s305, 1
        %s714 = smul.addr %s713, 8
        %s715 = scalar_lea.vmem [#allocation5], %s714
        // Predicated region
        $region65: #{tpu_custom_call.1} parent=55 // pred_check
          %p716 = pneg %p287
        $region66: #{tpu_custom_call.1} parent=55 // pred_check_branch
          %718 = sbr.rel (%p716) target = $region68
        $region67: #{tpu_custom_call.1} parent=55 // pred_region
          %720 = vsyncadd %s707, 0
          %s721 = smul.addr %s32, 8
          %s722 = scalar_lea.hbm %s9, %s721
          %s724 = sshll.u32 %s710, 4
          %s725 = int_to_ptr.vmem [resolvable:$true] %s724
          %s726 = sshll.u32 %s722, 4
          %s727 = int_to_ptr.hbm [resolvable:$true] %s726
          %729 = dma.vmem_to_hbm [thread:$0]  %s725, 128, %s727, %s707
        $region68: #{tpu_custom_call.1} parent=55 // pred_fallthru
          _
        // Predicated region
        $region69: #{tpu_custom_call.1} parent=55 // pred_check
          %p730 = pneg %p315
        $region70: #{tpu_custom_call.1} parent=55 // pred_check_branch
          %732 = sbr.rel (%p730) target = $region72
        $region71: #{tpu_custom_call.1} parent=55 // pred_region
          %734 = vsyncadd %s712, 0
          %s735 = smul.addr %s32, 4
          %s736 = sadd.s32 %s33, %s735
          %s737 = smul.addr %s736, 8
          %s738 = scalar_lea.hbm %s10, %s737
          %s740 = sshll.u32 %s715, 4
          %s741 = int_to_ptr.vmem [resolvable:$true] %s740
          %s742 = sshll.u32 %s738, 4
          %s743 = int_to_ptr.hbm [resolvable:$true] %s742
          %745 = dma.vmem_to_hbm [thread:$0]  %s741, 128, %s743, %s712
        $region72: #{tpu_custom_call.1} parent=55 // pred_fallthru
          _
      $region56: #{tpu_custom_call.1} parent=5 // pred_fallthru
        _
      %p746 = scmp.le.s32.totalorder 2, %s23
      // Predicated region
      $region73: #{tpu_custom_call.1} parent=5 // pred_check
        %p747 = pneg %p746
      $region74: #{tpu_custom_call.1} parent=5 // pred_check_branch
        %749 = sbr.rel (%p747) target = $region76
      $region75: #{tpu_custom_call.1} parent=5 // pred_region
        %s750 = ssub.s32 %s23, 2
        // Predicated region
        $region77: #{tpu_custom_call.1} parent=75 // pred_check
          %p751 = pneg %p293
        $region78: #{tpu_custom_call.1} parent=75 // pred_check_branch
          %753 = sbr.rel (%p751) target = $region80
        $region79: #{tpu_custom_call.1} parent=75 // pred_region
          %s754 = sand.u32 %s278, 1
          %s755 = scalar_lea.sflag [#allocation4], %s754
          %s756 = sand.u32 %s278, 1
          %s757 = smul.addr %s756, 8
          %s758 = scalar_lea.vmem [#allocation3], %s757
          %760 = dma.done %s755, 128
        $region80: #{tpu_custom_call.1} parent=75 // pred_fallthru
          _
        // Predicated region
        $region81: #{tpu_custom_call.1} parent=75 // pred_check
          %p761 = pneg %p321
        $region82: #{tpu_custom_call.1} parent=75 // pred_check_branch
          %763 = sbr.rel (%p761) target = $region84
        $region83: #{tpu_custom_call.1} parent=75 // pred_region
          %s764 = sand.u32 %s306, 1
          %s765 = scalar_lea.sflag [#allocation6], %s764
          %s766 = sand.u32 %s306, 1
          %s767 = smul.addr %s766, 8
          %s768 = scalar_lea.vmem [#allocation5], %s767
          %770 = dma.done %s765, 128
        $region84: #{tpu_custom_call.1} parent=75 // pred_fallthru
          _
      $region76: #{tpu_custom_call.1} parent=5 // pred_fallthru
        _
    $region6: #{tpu_custom_call.1} parent=1 // loop_footer
      %s27 = sadd.s32 1, %s23
    $region7: #{tpu_custom_call.1} parent=1 // loop_footer_branch
      %22 = sbr.rel target = $region3
    $region8: #{tpu_custom_call.1} parent=1 // loop_exit
      _
    %771 = vsyncpa [#allocation4], 1
    %s772 = scalar_lea.sflag [#allocation4], 1
    %773 = vsyncpa %s772, 1
    %774 = vsyncpa [#allocation6], 1
    %s775 = scalar_lea.sflag [#allocation6], 1
    %776 = vsyncpa %s775, 1

</llo_original>
